<compile_context>
chip_gen: v6e
topology: v6e:2x2x1
jax: 0.10.0
libtpu: 0.0.40
codegen_flags: <defaults>
</compile_context>

<pallas_src>
import functools

import jax
import jax.numpy as jnp
from jax import lax
from jax.experimental import pallas as pl
from jax.experimental.pallas import tpu as pltpu

_HIGHEST = jax.lax.Precision.HIGHEST  # XLA-side matmuls pinned to full f32.


def _lstm_kernel(tok_ref, emb_proj_ref, whh_ref, wfc_ref, bfc_ref, out_ref,
                 gates_ref, *, seq_len, batch, hidden_dim, vocab):
    """Fused embedding-gather + LSTM recurrence + O=1 fc head.

    tok_ref:      (T*B, 1)  int32 time-major token ids (rows t*B..t*B+B-1 are
                            the batch at timestep t)
    emb_proj_ref: (V, 4H)   emb_table @ W_ih^T + (b_ih + b_hh)
    whh_ref:      (H, 4H)   W_hh^T
    wfc_ref:      (1, H)    fc weight row (output_dim == 1)
    bfc_ref:      (1, 1)    fc bias
    out_ref:      (B, 1)    logits
    gates_ref:    (T*B, 4H) VMEM scratch for gate pre-activations
    """
    T, B, H, V = seq_len, batch, hidden_dim, vocab
    TB = T * B

    # ---- Phase 1: embedding gather == one-hot MXU pass over emb_proj ------
    # Mosaic keeps f32 dots at full f32 precision, so selected rows are
    # faithful to the precomputed projection table.
    tok = tok_ref[...]                                            # (TB, 1) i32
    vocab_iota = lax.broadcasted_iota(jnp.int32, (TB, V), 1)
    onehot = (vocab_iota == tok).astype(jnp.float32)              # (TB, V)
    gates_ref[...] = jnp.dot(onehot, emb_proj_ref[...],
                             preferred_element_type=jnp.float32)  # (TB, 4H)

    w_hh = whh_ref[...]                                           # hoisted

    # ---- Phase 2: serial recurrence ---------------------------------------
    def step(t, carry):
        h, c = carry
        row0 = pl.multiple_of(t * B, 8)                           # B % 8 == 0
        g = gates_ref[pl.ds(row0, B), :] + jnp.dot(
            h, w_hh, preferred_element_type=jnp.float32)          # (B, 4H)
        # Two full-width (B, 4H) EUP passes, then slice gate pieces.  The
        # i/f/o lanes of `th` and the g lanes of `sg` are computed-but-
        # discarded on purpose (same single-vreg EUP cost as narrow slices).
        sg = jax.nn.sigmoid(g)
        th = jnp.tanh(g)
        i_g = sg[:, 0 * H:1 * H]
        f_g = sg[:, 1 * H:2 * H]
        g_g = th[:, 2 * H:3 * H]
        o_g = sg[:, 3 * H:4 * H]
        c = f_g * c + i_g * g_g
        h = o_g * jnp.tanh(c)
        return h, c

    h0 = jnp.zeros((B, H), jnp.float32)
    c0 = jnp.zeros((B, H), jnp.float32)
    h, _ = lax.fori_loop(0, T, step, (h0, c0), unroll=(T <= 16))

    # ---- Phase 3: fused fc head (VPU multiply + XLU lane reduce, O=1) -----
    out_ref[...] = (jnp.sum(h * wfc_ref[...], axis=-1, keepdims=True)
                    + bfc_ref[...])


def prepare_lstm_params(emb_table, w_ih, w_hh, b_ih, b_hh, w_fc, b_fc):
    """One-time parameter preprocessing (hoisted off the forward hot path)."""
    H = w_hh.shape[1]
    O = w_fc.shape[0]
    # TODO(synk): general output_dim > 1 needs a small in-kernel matmul head.
    assert O == 1, "kernel fuses the fc head assuming output_dim == 1"
    bias = (b_ih + b_hh).astype(jnp.float32)                       # (4H,)
    emb_proj = jnp.dot(emb_table.astype(jnp.float32),
                       jnp.transpose(w_ih).astype(jnp.float32),
                       precision=_HIGHEST) + bias[None, :]         # (V, 4H)
    return dict(
        emb_proj=emb_proj,
        whh_t=jnp.transpose(w_hh).astype(jnp.float32),             # (H, 4H)
        w_fc_row=w_fc.astype(jnp.float32).reshape(1, H),           # (1, H)
        b_fc=b_fc.astype(jnp.float32).reshape(1, 1),               # (1, 1)
    )


@jax.jit
def lstm_apply(tokens, params):
    """Forward pass given pre-processed params.  tokens: (B, T) int32."""
    B, T = tokens.shape
    V, four_h = params["emb_proj"].shape
    H = four_h // 4

    # Pad batch to the f32 sublane width (8); padded rows use token 0 and are
    # sliced off below (LSTM is row-independent).  Callers should pack many
    # independent sequences per call: the recurrence matmul latency is flat up
    # to ~128-256 rows, so throughput scales ~linearly with B_pad.
    B_pad = max(8, ((B + 7) // 8) * 8)
    tok_tm = jnp.transpose(tokens).astype(jnp.int32)               # (T, B)
    tok_tm = jnp.pad(tok_tm, ((0, 0), (0, B_pad - B)))             # (T, B_pad)
    tok_flat = tok_tm.reshape(T * B_pad, 1)

    kernel = functools.partial(_lstm_kernel, seq_len=T, batch=B_pad,
                               hidden_dim=H, vocab=V)

    logits = pl.pallas_call(
        kernel,
        out_shape=jax.ShapeDtypeStruct((B_pad, 1), jnp.float32),
        in_specs=[pl.BlockSpec(memory_space=pltpu.MemorySpace.VMEM)
                  for _ in range(5)],
        out_specs=pl.BlockSpec(memory_space=pltpu.MemorySpace.VMEM),
        scratch_shapes=[pltpu.VMEM((T * B_pad, four_h), jnp.float32)],
    )(tok_flat, params["emb_proj"], params["whh_t"],
      params["w_fc_row"], params["b_fc"])

    return logits[:B].reshape(-1)                                  # == out.view(-1)


@jax.jit
def lstm_model_forward(tokens, emb_table, w_ih, w_hh, b_ih, b_hh, w_fc, b_fc):
    """Drop-in forward taking raw module params (prep fuses under this jit).

    Prefer prepare_lstm_params(...) once + lstm_apply(...) per step to keep
    the parameter preprocessing off the dispatch critical path.
    """
    return lstm_apply(tokens, prepare_lstm_params(
        emb_table, w_ih, w_hh, b_ih, b_hh, w_fc, b_fc))


def _reference_forward(tokens, emb_table, w_ih, w_hh, b_ih, b_hh, w_fc, b_fc):
    """Pure-JAX reference (original formulation), full-f32 matmuls."""
    B, T = tokens.shape
    H = w_hh.shape[1]
    x = jnp.take(emb_table.astype(jnp.float32), tokens, axis=0)    # (B, T, E)
    h = jnp.zeros((B, H), jnp.float32)
    c = jnp.zeros((B, H), jnp.float32)
    for t in range(T):
        gates = (jnp.dot(x[:, t, :], w_ih.T, precision=_HIGHEST)
                 + jnp.dot(h, w_hh.T, precision=_HIGHEST)
                 + b_ih + b_hh)
        i = jax.nn.sigmoid(gates[:, 0 * H:1 * H])
        f = jax.nn.sigmoid(gates[:, 1 * H:2 * H])
        g = jnp.tanh(gates[:, 2 * H:3 * H])
        o = jax.nn.sigmoid(gates[:, 3 * H:4 * H])
        c = f * c + i * g
        h = o * jnp.tanh(c)
    out = jnp.dot(h, w_fc.T, precision=_HIGHEST) + b_fc
    return out.reshape(-1)


if __name__ == "__main__":
    # Small shapes consistent with the module: vocab=64, emb_dim=32,
    # hidden_dim defaults to emb_dim (=32), 1 LSTM layer, output_dim=1.
    V, E = 64, 32
    H = E
    O = 1
    B, T = 2, 8

    key = jax.random.PRNGKey(0)
    k = jax.random.split(key, 8)
    emb_table = jax.random.normal(k[0], (V, E), jnp.float32) * 0.1
    w_ih = jax.random.normal(k[1], (4 * H, E), jnp.float32) * 0.1
    w_hh = jax.random.normal(k[2], (4 * H, H), jnp.float32) * 0.1
    b_ih = jax.random.normal(k[3], (4 * H,), jnp.float32) * 0.1
    b_hh = jax.random.normal(k[4], (4 * H,), jnp.float32) * 0.1
    w_fc = jax.random.normal(k[5], (O, H), jnp.float32) * 0.1
    b_fc = jax.random.normal(k[6], (O,), jnp.float32) * 0.1
    tokens = jax.random.randint(k[7], (B, T), 0, V, jnp.int32)

    # One-time param preprocessing (hoisted), then the fused kernel per call.
    params = jax.block_until_ready(prepare_lstm_params(
        emb_table, w_ih, w_hh, b_ih, b_hh, w_fc, b_fc))
    out = lstm_apply(tokens, params)
    jax.block_until_ready(out)

    ref = _reference_forward(tokens, emb_table, w_ih, w_hh, b_ih, b_hh,
                             w_fc, b_fc)
    assert out.shape == (B * O,)
    assert jnp.allclose(out, ref, atol=1e-5, rtol=1e-5), (out, ref)
    print("KERNEL_OK")
</pallas_src>

<mosaic_0001>
module attributes {stable_mosaic.version = 11 : i64} {
  func.func @_lstm_kernel(%arg0: memref<64x1xi32, #tpu.memory_space<vmem>>, %arg1: memref<64x128xf32, #tpu.memory_space<vmem>>, %arg2: memref<32x128xf32, #tpu.memory_space<vmem>>, %arg3: memref<1x32xf32, #tpu.memory_space<vmem>>, %arg4: memref<1x1xf32, #tpu.memory_space<vmem>>, %arg5: memref<8x1xf32, #tpu.memory_space<vmem>>, %arg6: memref<64x128xf32, #tpu.memory_space<vmem>>) attributes {dimension_semantics = [], scalar_prefetch = 0 : i64, scratch_operands = 1 : i64, tpu.core_type = #tpu.core_type<tc>} {
    %c0 = arith.constant 0 : index
    %c0_0 = arith.constant 0 : index
    %0 = vector.load %arg0[%c0, %c0_0] : memref<64x1xi32, #tpu.memory_space<vmem>>, vector<64x1xi32>
    %1 = tpu.iota {dimensions = array<i32: 1>} : vector<64x64xi32>
    %2 = vector.broadcast %0 : vector<64x1xi32> to vector<64x64xi32>
    %3 = arith.cmpi eq, %1, %2 : vector<64x64xi32>
    %4 = arith.extui %3 : vector<64x64xi1> to vector<64x64xi32>
    %5 = arith.sitofp %4 : vector<64x64xi32> to vector<64x64xf32>
    %c0_1 = arith.constant 0 : index
    %c0_2 = arith.constant 0 : index
    %6 = vector.load %arg1[%c0_1, %c0_2] : memref<64x128xf32, #tpu.memory_space<vmem>>, vector<64x128xf32>
    %cst = arith.constant dense<0.000000e+00> : vector<64x128xf32>
    %7 = tpu.matmul %5, %6, %cst {dimension_numbers = #tpu.dot_dimension_numbers<[1], [0], [0], [1], [0, 0, 1, 1], [], []>} : vector<64x64xf32>, vector<64x128xf32>, vector<64x128xf32> -> vector<64x128xf32>
    %c0_3 = arith.constant 0 : index
    %c0_4 = arith.constant 0 : index
    %8 = vector.load %arg6[%c0_3, %c0_4] : memref<64x128xf32, #tpu.memory_space<vmem>>, vector<64x128xf32>
    tpu.vector_store %arg6[%c0_3, %c0_4], %7 {strides = array<i32>} : memref<64x128xf32, #tpu.memory_space<vmem>>, vector<64x128xf32>,
    %c0_5 = arith.constant 0 : index
    %c0_6 = arith.constant 0 : index
    %9 = vector.load %arg2[%c0_5, %c0_6] : memref<32x128xf32, #tpu.memory_space<vmem>>, vector<32x128xf32>
    %cst_7 = arith.constant 0.000000e+00 : f32
    %10 = vector.broadcast %cst_7 : f32 to vector<8x32xf32>
    %cst_8 = arith.constant 0.000000e+00 : f32
    %11 = vector.broadcast %cst_8 : f32 to vector<8x32xf32>
    %c0_i32 = arith.constant 0 : i32
    %c8_i32 = arith.constant 8 : i32
    %12 = arith.muli %c0_i32, %c8_i32 : i32
    %13 = tpu.assume_multiple %12, 8 : i32
    %14 = arith.index_cast %13 : i32 to index
    %c0_9 = arith.constant 0 : index
    %15 = vector.load %arg6[%14, %c0_9] : memref<64x128xf32, #tpu.memory_space<vmem>>, vector<8x128xf32>
    %cst_10 = arith.constant dense<0.000000e+00> : vector<8x128xf32>
    %16 = tpu.matmul %10, %9, %cst_10 {dimension_numbers = #tpu.dot_dimension_numbers<[1], [0], [0], [1], [0, 0, 1, 1], [], []>} : vector<8x32xf32>, vector<32x128xf32>, vector<8x128xf32> -> vector<8x128xf32>
    %17 = arith.addf %15, %16 : vector<8x128xf32>
    %18 = arith.negf %17 : vector<8x128xf32>
    %19 = math.exp %18 : vector<8x128xf32>
    %cst_11 = arith.constant 1.000000e+00 : f32
    %20 = vector.broadcast %cst_11 : f32 to vector<8x128xf32>
    %21 = arith.addf %20, %19 : vector<8x128xf32>
    %22 = arith.divf %20, %21 : vector<8x128xf32>
    %23 = math.tanh %17 : vector<8x128xf32>
    %24 = vector.extract_strided_slice %22 {offsets = [0, 0], sizes = [8, 32], strides = [1, 1]} : vector<8x128xf32> to vector<8x32xf32>
    %25 = vector.extract_strided_slice %22 {offsets = [0, 32], sizes = [8, 32], strides = [1, 1]} : vector<8x128xf32> to vector<8x32xf32>
    %26 = vector.extract_strided_slice %23 {offsets = [0, 64], sizes = [8, 32], strides = [1, 1]} : vector<8x128xf32> to vector<8x32xf32>
    %27 = vector.extract_strided_slice %22 {offsets = [0, 96], sizes = [8, 32], strides = [1, 1]} : vector<8x128xf32> to vector<8x32xf32>
    %28 = arith.mulf %25, %11 : vector<8x32xf32>
    %29 = arith.mulf %24, %26 : vector<8x32xf32>
    %30 = arith.addf %28, %29 : vector<8x32xf32>
    %31 = math.tanh %30 : vector<8x32xf32>
    %32 = arith.mulf %27, %31 : vector<8x32xf32>
    %c1_i32 = arith.constant 1 : i32
    %c8_i32_12 = arith.constant 8 : i32
    %33 = arith.muli %c1_i32, %c8_i32_12 : i32
    %34 = tpu.assume_multiple %33, 8 : i32
    %35 = arith.index_cast %34 : i32 to index
    %c0_13 = arith.constant 0 : index
    %36 = vector.load %arg6[%35, %c0_13] : memref<64x128xf32, #tpu.memory_space<vmem>>, vector<8x128xf32>
    %cst_14 = arith.constant dense<0.000000e+00> : vector<8x128xf32>
    %37 = tpu.matmul %32, %9, %cst_14 {dimension_numbers = #tpu.dot_dimension_numbers<[1], [0], [0], [1], [0, 0, 1, 1], [], []>} : vector<8x32xf32>, vector<32x128xf32>, vector<8x128xf32> -> vector<8x128xf32>
    %38 = arith.addf %36, %37 : vector<8x128xf32>
    %39 = arith.negf %38 : vector<8x128xf32>
    %40 = math.exp %39 : vector<8x128xf32>
    %cst_15 = arith.constant 1.000000e+00 : f32
    %41 = vector.broadcast %cst_15 : f32 to vector<8x128xf32>
    %42 = arith.addf %41, %40 : vector<8x128xf32>
    %43 = arith.divf %41, %42 : vector<8x128xf32>
    %44 = math.tanh %38 : vector<8x128xf32>
    %45 = vector.extract_strided_slice %43 {offsets = [0, 0], sizes = [8, 32], strides = [1, 1]} : vector<8x128xf32> to vector<8x32xf32>
    %46 = vector.extract_strided_slice %43 {offsets = [0, 32], sizes = [8, 32], strides = [1, 1]} : vector<8x128xf32> to vector<8x32xf32>
    %47 = vector.extract_strided_slice %44 {offsets = [0, 64], sizes = [8, 32], strides = [1, 1]} : vector<8x128xf32> to vector<8x32xf32>
    %48 = vector.extract_strided_slice %43 {offsets = [0, 96], sizes = [8, 32], strides = [1, 1]} : vector<8x128xf32> to vector<8x32xf32>
    %49 = arith.mulf %46, %30 : vector<8x32xf32>
    %50 = arith.mulf %45, %47 : vector<8x32xf32>
    %51 = arith.addf %49, %50 : vector<8x32xf32>
    %52 = math.tanh %51 : vector<8x32xf32>
    %53 = arith.mulf %48, %52 : vector<8x32xf32>
    %c2_i32 = arith.constant 2 : i32
    %c8_i32_16 = arith.constant 8 : i32
    %54 = arith.muli %c2_i32, %c8_i32_16 : i32
    %55 = tpu.assume_multiple %54, 8 : i32
    %56 = arith.index_cast %55 : i32 to index
    %c0_17 = arith.constant 0 : index
    %57 = vector.load %arg6[%56, %c0_17] : memref<64x128xf32, #tpu.memory_space<vmem>>, vector<8x128xf32>
    %cst_18 = arith.constant dense<0.000000e+00> : vector<8x128xf32>
    %58 = tpu.matmul %53, %9, %cst_18 {dimension_numbers = #tpu.dot_dimension_numbers<[1], [0], [0], [1], [0, 0, 1, 1], [], []>} : vector<8x32xf32>, vector<32x128xf32>, vector<8x128xf32> -> vector<8x128xf32>
    %59 = arith.addf %57, %58 : vector<8x128xf32>
    %60 = arith.negf %59 : vector<8x128xf32>
    %61 = math.exp %60 : vector<8x128xf32>
    %cst_19 = arith.constant 1.000000e+00 : f32
    %62 = vector.broadcast %cst_19 : f32 to vector<8x128xf32>
    %63 = arith.addf %62, %61 : vector<8x128xf32>
    %64 = arith.divf %62, %63 : vector<8x128xf32>
    %65 = math.tanh %59 : vector<8x128xf32>
    %66 = vector.extract_strided_slice %64 {offsets = [0, 0], sizes = [8, 32], strides = [1, 1]} : vector<8x128xf32> to vector<8x32xf32>
    %67 = vector.extract_strided_slice %64 {offsets = [0, 32], sizes = [8, 32], strides = [1, 1]} : vector<8x128xf32> to vector<8x32xf32>
    %68 = vector.extract_strided_slice %65 {offsets = [0, 64], sizes = [8, 32], strides = [1, 1]} : vector<8x128xf32> to vector<8x32xf32>
    %69 = vector.extract_strided_slice %64 {offsets = [0, 96], sizes = [8, 32], strides = [1, 1]} : vector<8x128xf32> to vector<8x32xf32>
    %70 = arith.mulf %67, %51 : vector<8x32xf32>
    %71 = arith.mulf %66, %68 : vector<8x32xf32>
    %72 = arith.addf %70, %71 : vector<8x32xf32>
    %73 = math.tanh %72 : vector<8x32xf32>
    %74 = arith.mulf %69, %73 : vector<8x32xf32>
    %c3_i32 = arith.constant 3 : i32
    %c8_i32_20 = arith.constant 8 : i32
    %75 = arith.muli %c3_i32, %c8_i32_20 : i32
    %76 = tpu.assume_multiple %75, 8 : i32
    %77 = arith.index_cast %76 : i32 to index
    %c0_21 = arith.constant 0 : index
    %78 = vector.load %arg6[%77, %c0_21] : memref<64x128xf32, #tpu.memory_space<vmem>>, vector<8x128xf32>
    %cst_22 = arith.constant dense<0.000000e+00> : vector<8x128xf32>
    %79 = tpu.matmul %74, %9, %cst_22 {dimension_numbers = #tpu.dot_dimension_numbers<[1], [0], [0], [1], [0, 0, 1, 1], [], []>} : vector<8x32xf32>, vector<32x128xf32>, vector<8x128xf32> -> vector<8x128xf32>
    %80 = arith.addf %78, %79 : vector<8x128xf32>
    %81 = arith.negf %80 : vector<8x128xf32>
    %82 = math.exp %81 : vector<8x128xf32>
    %cst_23 = arith.constant 1.000000e+00 : f32
    %83 = vector.broadcast %cst_23 : f32 to vector<8x128xf32>
    %84 = arith.addf %83, %82 : vector<8x128xf32>
    %85 = arith.divf %83, %84 : vector<8x128xf32>
    %86 = math.tanh %80 : vector<8x128xf32>
    %87 = vector.extract_strided_slice %85 {offsets = [0, 0], sizes = [8, 32], strides = [1, 1]} : vector<8x128xf32> to vector<8x32xf32>
    %88 = vector.extract_strided_slice %85 {offsets = [0, 32], sizes = [8, 32], strides = [1, 1]} : vector<8x128xf32> to vector<8x32xf32>
    %89 = vector.extract_strided_slice %86 {offsets = [0, 64], sizes = [8, 32], strides = [1, 1]} : vector<8x128xf32> to vector<8x32xf32>
    %90 = vector.extract_strided_slice %85 {offsets = [0, 96], sizes = [8, 32], strides = [1, 1]} : vector<8x128xf32> to vector<8x32xf32>
    %91 = arith.mulf %88, %72 : vector<8x32xf32>
    %92 = arith.mulf %87, %89 : vector<8x32xf32>
    %93 = arith.addf %91, %92 : vector<8x32xf32>
    %94 = math.tanh %93 : vector<8x32xf32>
    %95 = arith.mulf %90, %94 : vector<8x32xf32>
    %c4_i32 = arith.constant 4 : i32
    %c8_i32_24 = arith.constant 8 : i32
    %96 = arith.muli %c4_i32, %c8_i32_24 : i32
    %97 = tpu.assume_multiple %96, 8 : i32
    %98 = arith.index_cast %97 : i32 to index
    %c0_25 = arith.constant 0 : index
    %99 = vector.load %arg6[%98, %c0_25] : memref<64x128xf32, #tpu.memory_space<vmem>>, vector<8x128xf32>
    %cst_26 = arith.constant dense<0.000000e+00> : vector<8x128xf32>
    %100 = tpu.matmul %95, %9, %cst_26 {dimension_numbers = #tpu.dot_dimension_numbers<[1], [0], [0], [1], [0, 0, 1, 1], [], []>} : vector<8x32xf32>, vector<32x128xf32>, vector<8x128xf32> -> vector<8x128xf32>
    %101 = arith.addf %99, %100 : vector<8x128xf32>
    %102 = arith.negf %101 : vector<8x128xf32>
    %103 = math.exp %102 : vector<8x128xf32>
    %cst_27 = arith.constant 1.000000e+00 : f32
    %104 = vector.broadcast %cst_27 : f32 to vector<8x128xf32>
    %105 = arith.addf %104, %103 : vector<8x128xf32>
    %106 = arith.divf %104, %105 : vector<8x128xf32>
    %107 = math.tanh %101 : vector<8x128xf32>
    %108 = vector.extract_strided_slice %106 {offsets = [0, 0], sizes = [8, 32], strides = [1, 1]} : vector<8x128xf32> to vector<8x32xf32>
    %109 = vector.extract_strided_slice %106 {offsets = [0, 32], sizes = [8, 32], strides = [1, 1]} : vector<8x128xf32> to vector<8x32xf32>
    %110 = vector.extract_strided_slice %107 {offsets = [0, 64], sizes = [8, 32], strides = [1, 1]} : vector<8x128xf32> to vector<8x32xf32>
    %111 = vector.extract_strided_slice %106 {offsets = [0, 96], sizes = [8, 32], strides = [1, 1]} : vector<8x128xf32> to vector<8x32xf32>
    %112 = arith.mulf %109, %93 : vector<8x32xf32>
    %113 = arith.mulf %108, %110 : vector<8x32xf32>
    %114 = arith.addf %112, %113 : vector<8x32xf32>
    %115 = math.tanh %114 : vector<8x32xf32>
    %116 = arith.mulf %111, %115 : vector<8x32xf32>
    %c5_i32 = arith.constant 5 : i32
    %c8_i32_28 = arith.constant 8 : i32
    %117 = arith.muli %c5_i32, %c8_i32_28 : i32
    %118 = tpu.assume_multiple %117, 8 : i32
    %119 = arith.index_cast %118 : i32 to index
    %c0_29 = arith.constant 0 : index
    %120 = vector.load %arg6[%119, %c0_29] : memref<64x128xf32, #tpu.memory_space<vmem>>, vector<8x128xf32>
    %cst_30 = arith.constant dense<0.000000e+00> : vector<8x128xf32>
    %121 = tpu.matmul %116, %9, %cst_30 {dimension_numbers = #tpu.dot_dimension_numbers<[1], [0], [0], [1], [0, 0, 1, 1], [], []>} : vector<8x32xf32>, vector<32x128xf32>, vector<8x128xf32> -> vector<8x128xf32>
    %122 = arith.addf %120, %121 : vector<8x128xf32>
    %123 = arith.negf %122 : vector<8x128xf32>
    %124 = math.exp %123 : vector<8x128xf32>
    %cst_31 = arith.constant 1.000000e+00 : f32
    %125 = vector.broadcast %cst_31 : f32 to vector<8x128xf32>
    %126 = arith.addf %125, %124 : vector<8x128xf32>
    %127 = arith.divf %125, %126 : vector<8x128xf32>
    %128 = math.tanh %122 : vector<8x128xf32>
    %129 = vector.extract_strided_slice %127 {offsets = [0, 0], sizes = [8, 32], strides = [1, 1]} : vector<8x128xf32> to vector<8x32xf32>
    %130 = vector.extract_strided_slice %127 {offsets = [0, 32], sizes = [8, 32], strides = [1, 1]} : vector<8x128xf32> to vector<8x32xf32>
    %131 = vector.extract_strided_slice %128 {offsets = [0, 64], sizes = [8, 32], strides = [1, 1]} : vector<8x128xf32> to vector<8x32xf32>
    %132 = vector.extract_strided_slice %127 {offsets = [0, 96], sizes = [8, 32], strides = [1, 1]} : vector<8x128xf32> to vector<8x32xf32>
    %133 = arith.mulf %130, %114 : vector<8x32xf32>
    %134 = arith.mulf %129, %131 : vector<8x32xf32>
    %135 = arith.addf %133, %134 : vector<8x32xf32>
    %136 = math.tanh %135 : vector<8x32xf32>
    %137 = arith.mulf %132, %136 : vector<8x32xf32>
    %c6_i32 = arith.constant 6 : i32
    %c8_i32_32 = arith.constant 8 : i32
    %138 = arith.muli %c6_i32, %c8_i32_32 : i32
    %139 = tpu.assume_multiple %138, 8 : i32
    %140 = arith.index_cast %139 : i32 to index
    %c0_33 = arith.constant 0 : index
    %141 = vector.load %arg6[%140, %c0_33] : memref<64x128xf32, #tpu.memory_space<vmem>>, vector<8x128xf32>
    %cst_34 = arith.constant dense<0.000000e+00> : vector<8x128xf32>
    %142 = tpu.matmul %137, %9, %cst_34 {dimension_numbers = #tpu.dot_dimension_numbers<[1], [0], [0], [1], [0, 0, 1, 1], [], []>} : vector<8x32xf32>, vector<32x128xf32>, vector<8x128xf32> -> vector<8x128xf32>
    %143 = arith.addf %141, %142 : vector<8x128xf32>
    %144 = arith.negf %143 : vector<8x128xf32>
    %145 = math.exp %144 : vector<8x128xf32>
    %cst_35 = arith.constant 1.000000e+00 : f32
    %146 = vector.broadcast %cst_35 : f32 to vector<8x128xf32>
    %147 = arith.addf %146, %145 : vector<8x128xf32>
    %148 = arith.divf %146, %147 : vector<8x128xf32>
    %149 = math.tanh %143 : vector<8x128xf32>
    %150 = vector.extract_strided_slice %148 {offsets = [0, 0], sizes = [8, 32], strides = [1, 1]} : vector<8x128xf32> to vector<8x32xf32>
    %151 = vector.extract_strided_slice %148 {offsets = [0, 32], sizes = [8, 32], strides = [1, 1]} : vector<8x128xf32> to vector<8x32xf32>
    %152 = vector.extract_strided_slice %149 {offsets = [0, 64], sizes = [8, 32], strides = [1, 1]} : vector<8x128xf32> to vector<8x32xf32>
    %153 = vector.extract_strided_slice %148 {offsets = [0, 96], sizes = [8, 32], strides = [1, 1]} : vector<8x128xf32> to vector<8x32xf32>
    %154 = arith.mulf %151, %135 : vector<8x32xf32>
    %155 = arith.mulf %150, %152 : vector<8x32xf32>
    %156 = arith.addf %154, %155 : vector<8x32xf32>
    %157 = math.tanh %156 : vector<8x32xf32>
    %158 = arith.mulf %153, %157 : vector<8x32xf32>
    %c7_i32 = arith.constant 7 : i32
    %c8_i32_36 = arith.constant 8 : i32
    %159 = arith.muli %c7_i32, %c8_i32_36 : i32
    %160 = tpu.assume_multiple %159, 8 : i32
    %161 = arith.index_cast %160 : i32 to index
    %c0_37 = arith.constant 0 : index
    %162 = vector.load %arg6[%161, %c0_37] : memref<64x128xf32, #tpu.memory_space<vmem>>, vector<8x128xf32>
    %cst_38 = arith.constant dense<0.000000e+00> : vector<8x128xf32>
    %163 = tpu.matmul %158, %9, %cst_38 {dimension_numbers = #tpu.dot_dimension_numbers<[1], [0], [0], [1], [0, 0, 1, 1], [], []>} : vector<8x32xf32>, vector<32x128xf32>, vector<8x128xf32> -> vector<8x128xf32>
    %164 = arith.addf %162, %163 : vector<8x128xf32>
    %165 = arith.negf %164 : vector<8x128xf32>
    %166 = math.exp %165 : vector<8x128xf32>
    %cst_39 = arith.constant 1.000000e+00 : f32
    %167 = vector.broadcast %cst_39 : f32 to vector<8x128xf32>
    %168 = arith.addf %167, %166 : vector<8x128xf32>
    %169 = arith.divf %167, %168 : vector<8x128xf32>
    %170 = math.tanh %164 : vector<8x128xf32>
    %171 = vector.extract_strided_slice %169 {offsets = [0, 0], sizes = [8, 32], strides = [1, 1]} : vector<8x128xf32> to vector<8x32xf32>
    %172 = vector.extract_strided_slice %169 {offsets = [0, 32], sizes = [8, 32], strides = [1, 1]} : vector<8x128xf32> to vector<8x32xf32>
    %173 = vector.extract_strided_slice %170 {offsets = [0, 64], sizes = [8, 32], strides = [1, 1]} : vector<8x128xf32> to vector<8x32xf32>
    %174 = vector.extract_strided_slice %169 {offsets = [0, 96], sizes = [8, 32], strides = [1, 1]} : vector<8x128xf32> to vector<8x32xf32>
    %175 = arith.mulf %172, %156 : vector<8x32xf32>
    %176 = arith.mulf %171, %173 : vector<8x32xf32>
    %177 = arith.addf %175, %176 : vector<8x32xf32>
    %178 = math.tanh %177 : vector<8x32xf32>
    %179 = arith.mulf %174, %178 : vector<8x32xf32>
    %c8_i32_40 = arith.constant 8 : i32
    %c0_41 = arith.constant 0 : index
    %c0_42 = arith.constant 0 : index
    %180 = vector.load %arg3[%c0_41, %c0_42] : memref<1x32xf32, #tpu.memory_space<vmem>>, vector<1x32xf32>
    %181 = vector.broadcast %180 : vector<1x32xf32> to vector<8x32xf32>
    %182 = arith.mulf %179, %181 : vector<8x32xf32>
    %cst_43 = arith.constant dense<0.000000e+00> : vector<8xf32>
    %183 = vector.multi_reduction <add>, %182, %cst_43 [1] : vector<8x32xf32> to vector<8xf32>
    %184 = vector.shape_cast %183 : vector<8xf32> to vector<8x1xf32>
    %c0_44 = arith.constant 0 : index
    %c0_45 = arith.constant 0 : index
    %185 = vector.load %arg4[%c0_44, %c0_45] : memref<1x1xf32, #tpu.memory_space<vmem>>, vector<1x1xf32>
    %186 = vector.broadcast %185 : vector<1x1xf32> to vector<8x1xf32>
    %187 = arith.addf %184, %186 : vector<8x1xf32>
    %c0_46 = arith.constant 0 : index
    %c0_47 = arith.constant 0 : index
    %188 = vector.load %arg5[%c0_46, %c0_47] : memref<8x1xf32, #tpu.memory_space<vmem>>, vector<8x1xf32>
    tpu.vector_store %arg5[%c0_46, %c0_47], %187 {strides = array<i32>} : memref<8x1xf32, #tpu.memory_space<vmem>>, vector<8x1xf32>,
    return
  }
}

</mosaic_0001>

<llo_original>
// kernel: lstm_apply.1
$region0: #{lstm_apply.1}
  #allocation0 [shape = 'u32[]', space=smem, size = 0x4, offset = 0x4, fixed_abs, tag = 'smem constant byte address 0x4 - core index']
  #allocation1 [shape = 'u32[144,128]{1,0:T(1,128)}', space=vmem, size = 0x12000, scoped, tag = 'internal scratch']
  #allocation2 [shape = 'f32[64,128]{1,0:T(8,128)}', space=vmem, size = 0x8000, scoped, tag = 'scratch operand']
  #allocation3 [shape = 'f32[1,1]{1,0:T(1,128)S(1)}', space=vmem, size = 0x200, scoped, tag = 'scoped memory for lstm_apply.1']
  %s0 = inlined_call_operand.vmem [shape: s32[64,1], index: 0, kind: input, shape index: {}]
  %s1 = inlined_call_operand.vmem [shape: f32[64,128], index: 1, kind: input, shape index: {}]
  %s2 = inlined_call_operand.vmem [shape: f32[32,128], index: 2, kind: input, shape index: {}]
  %s3 = inlined_call_operand.vmem [shape: f32[1,32], index: 3, kind: input, shape index: {}]
  %s4 = inlined_call_operand.<no memory space> [shape: f32[1,1], index: 4, kind: input, shape index: {}]
  %s5 = inlined_call_operand.vmem [shape: f32[8,1], index: 5, kind: output, shape index: {}]
  %s6 = sld [smem:[#allocation0]]
  $region30: #{lstm_apply.1} parent=0
    _
  %s8 = ssub.s32 1, %s6
  %s9 = scalar_select 0, %s8, %s6
  %v10 = vstv %s4
  %11 = vst [vmem:[#allocation3] sm:$0x1] %v10
  // Predicated region
  $region2: #{lstm_apply.1} parent=0 // pred_check
    _
  $region3: #{lstm_apply.1} parent=0 // pred_check_branch
    %13 = sbr.rel (0) target = $region5
  $region4: #{lstm_apply.1} parent=0 // pred_region
    _
  $region5: #{lstm_apply.1} parent=0 // pred_fallthru
    _
  // Predicated region
  $region6: #{lstm_apply.1} parent=0 // pred_check
    _
  $region7: #{lstm_apply.1} parent=0 // pred_check_branch
    %15 = sbr.rel (0) target = $region9
  $region8: #{lstm_apply.1} parent=0 // pred_region
    _
  $region9: #{lstm_apply.1} parent=0 // pred_fallthru
    _
  // Predicated region
  $region10: #{lstm_apply.1} parent=0 // pred_check
    _
  $region11: #{lstm_apply.1} parent=0 // pred_check_branch
    %17 = sbr.rel (0) target = $region13
  $region12: #{lstm_apply.1} parent=0 // pred_region
    _
  $region13: #{lstm_apply.1} parent=0 // pred_fallthru
    _
  // Predicated region
  $region14: #{lstm_apply.1} parent=0 // pred_check
    _
  $region15: #{lstm_apply.1} parent=0 // pred_check_branch
    %19 = sbr.rel (0) target = $region17
  $region16: #{lstm_apply.1} parent=0 // pred_region
    _
  $region17: #{lstm_apply.1} parent=0 // pred_fallthru
    _
  // Predicated region
  $region18: #{lstm_apply.1} parent=0 // pred_check
    _
  $region19: #{lstm_apply.1} parent=0 // pred_check_branch
    %21 = sbr.rel (0) target = $region21
  $region20: #{lstm_apply.1} parent=0 // pred_region
    _
  $region21: #{lstm_apply.1} parent=0 // pred_fallthru
    _
  %v22 = vld [vmem:[%s0] sm:$0xff]
  %v23 = vld [vmem:[%s0 + $0x8] sm:$0xff]
  %v24 = vld [vmem:[%s0 + $0x10] sm:$0xff]
  %v25 = vld [vmem:[%s0 + $0x18] sm:$0xff]
  %v26 = vld [vmem:[%s0 + $0x20] sm:$0xff]
  %v27 = vld [vmem:[%s0 + $0x28] sm:$0xff]
  %v28 = vld [vmem:[%s0 + $0x30] sm:$0xff]
  %v29 = vld [vmem:[%s0 + $0x38] sm:$0xff]
  %v30 = vlaneseq
  %v31 = vand.u32 %v30, 127
  %32 = vset.pattern.permute.xlu0 0
  %33 = vperm.xlu0 %32, %v22
  %v34 = vpop.permute.xlu0 %33
  %35 = vset.pattern.permute.xlu0 0
  %36 = vperm.xlu0 %35, %v23
  %v37 = vpop.permute.xlu0 %36
  %38 = vset.pattern.permute.xlu0 0
  %39 = vperm.xlu0 %38, %v24
  %v40 = vpop.permute.xlu0 %39
  %41 = vset.pattern.permute.xlu0 0
  %42 = vperm.xlu0 %41, %v25
  %v43 = vpop.permute.xlu0 %42
  %44 = vset.pattern.permute.xlu0 0
  %45 = vperm.xlu0 %44, %v26
  %v46 = vpop.permute.xlu0 %45
  %47 = vset.pattern.permute.xlu0 0
  %48 = vperm.xlu0 %47, %v27
  %v49 = vpop.permute.xlu0 %48
  %50 = vset.pattern.permute.xlu0 0
  %51 = vperm.xlu0 %50, %v28
  %v52 = vpop.permute.xlu0 %51
  %53 = vset.pattern.permute.xlu0 0
  %54 = vperm.xlu0 %53, %v29
  %v55 = vpop.permute.xlu0 %54
  %vm56 = vcmp.eq.s32.totalorder %v31, %v34
  %vm57 = vcmp.eq.s32.totalorder %v31, %v37
  %vm58 = vcmp.eq.s32.totalorder %v31, %v40
  %vm59 = vcmp.eq.s32.totalorder %v31, %v43
  %vm60 = vcmp.eq.s32.totalorder %v31, %v46
  %vm61 = vcmp.eq.s32.totalorder %v31, %v49
  %vm62 = vcmp.eq.s32.totalorder %v31, %v52
  %vm63 = vcmp.eq.s32.totalorder %v31, %v55
  %v64 = vsel %vm56, 1, 0
  %v65 = vsel %vm57, 1, 0
  %v66 = vsel %vm58, 1, 0
  %v67 = vsel %vm59, 1, 0
  %v68 = vsel %vm60, 1, 0
  %v69 = vsel %vm61, 1, 0
  %v70 = vsel %vm62, 1, 0
  %v71 = vsel %vm63, 1, 0
  %v72 = vcvt.s32.f32 %v64
  %v73 = vcvt.s32.f32 %v65
  %v74 = vcvt.s32.f32 %v66
  %v75 = vcvt.s32.f32 %v67
  %v76 = vcvt.s32.f32 %v68
  %v77 = vcvt.s32.f32 %v69
  %v78 = vcvt.s32.f32 %v70
  %v79 = vcvt.s32.f32 %v71
  %v80 = vld [vmem:[%s1] sm:$0xff]
  %v81 = vld [vmem:[%s1 + $0x8] sm:$0xff]
  %v82 = vld [vmem:[%s1 + $0x10] sm:$0xff]
  %v83 = vld [vmem:[%s1 + $0x18] sm:$0xff]
  %v84 = vld [vmem:[%s1 + $0x20] sm:$0xff]
  %v85 = vld [vmem:[%s1 + $0x28] sm:$0xff]
  %v86 = vld [vmem:[%s1 + $0x30] sm:$0xff]
  %v87 = vld [vmem:[%s1 + $0x38] sm:$0xff]
  %vm88 = vcmask 523264
  %v90 = vsel %vm88, %v72, 0
  %v93 = vsel %vm88, %v73, 0
  %v96 = vsel %vm88, %v74, 0
  %v99 = vsel %vm88, %v75, 0
  %v102 = vsel %vm88, %v76, 0
  %v105 = vsel %vm88, %v77, 0
  %v108 = vsel %vm88, %v78, 0
  %v111 = vsel %vm88, %v79, 0
  %113 = vmatprep.subr.mxu0 0.0
  %114 = vmatpush1.msra.mxu0 0.0
  %115 = vmatprep.subr.mxu0 0.0
  %116 = vmatpush1.msra.mxu0 0.0
  %117 = vmatprep.subr.mxu0 0.0
  %118 = vmatpush1.msra.mxu0 0.0
  %119 = vmatprep.subr.mxu0 0.0
  %120 = vmatpush1.msra.mxu0 0.0
  %121 = vmatprep.subr.mxu0 0.0
  %122 = vmatpush1.msra.mxu0 0.0
  %123 = vmatprep.subr.mxu0 0.0
  %124 = vmatpush1.msra.mxu0 0.0
  %125 = vmatprep.subr.mxu0 0.0
  %126 = vmatpush1.msra.mxu0 0.0
  %127 = vmatprep.subr.mxu0 0.0
  %128 = vmatpush1.msra.mxu0 0.0
  %129 = vmatprep.subr.mxu0 0.0
  %130 = vmatpush1.msra.mxu0 %v87
  %131 = vmatprep.subr.mxu0 0.0
  %132 = vmatpush1.msra.mxu0 %v86
  %133 = vmatprep.subr.mxu0 0.0
  %134 = vmatpush1.msra.mxu0 %v85
  %135 = vmatprep.subr.mxu0 0.0
  %136 = vmatpush1.msra.mxu0 %v84
  %137 = vmatprep.subr.mxu0 0.0
  %138 = vmatpush1.msra.mxu0 %v83
  %139 = vmatprep.subr.mxu0 0.0
  %140 = vmatpush1.msra.mxu0 %v82
  %141 = vmatprep.subr.mxu0 0.0
  %142 = vmatpush1.msra.mxu0 %v81
  %143 = vmatprep.subr.mxu0 0.0
  %144 = vmatpush1.msra.mxu0 %v80
  %145 = vmatprep.subr.mxu0 0.0
  %146 = vmatpush2.msra.mxu0 0.0
  %147 = vmatprep.subr.mxu0 0.0
  %148 = vmatpush2.msra.mxu0 0.0
  %149 = vmatprep.subr.mxu0 0.0
  %150 = vmatpush2.msra.mxu0 0.0
  %151 = vmatprep.subr.mxu0 0.0
  %152 = vmatpush2.msra.mxu0 0.0
  %153 = vmatprep.subr.mxu0 0.0
  %154 = vmatpush2.msra.mxu0 0.0
  %155 = vmatprep.subr.mxu0 0.0
  %156 = vmatpush2.msra.mxu0 0.0
  %157 = vmatprep.subr.mxu0 0.0
  %158 = vmatpush2.msra.mxu0 0.0
  %159 = vmatprep.subr.mxu0 0.0
  %160 = vmatpush2.msra.mxu0 0.0
  %161 = vmatprep.subr.mxu0 0.0
  %162 = vmatpush2.msra.mxu0 0.0
  %163 = vmatprep.subr.mxu0 0.0
  %164 = vmatpush2.msra.mxu0 0.0
  %165 = vmatprep.subr.mxu0 0.0
  %166 = vmatpush2.msra.mxu0 0.0
  %167 = vmatprep.subr.mxu0 0.0
  %168 = vmatpush2.msra.mxu0 0.0
  %169 = vmatprep.subr.mxu0 0.0
  %170 = vmatpush2.msra.mxu0 0.0
  %171 = vmatprep.subr.mxu0 0.0
  %172 = vmatpush2.msra.mxu0 0.0
  %173 = vmatprep.subr.mxu0 0.0
  %174 = vmatpush2.msra.mxu0 0.0
  %175 = vmatprep.subr.mxu0 0.0
  %176 = vmatpush2.msra.mxu0 0.0
  %177 = vmatprep.mubr.f32.mxu0 0.0
  %178 = vmatmul.mubr.f32.gmra.mxu0 %v90
  %v179 = vpop.f32.mrf.mxu0
  %v180 = vadd.f32 0.0, %v179
  %v181 = vpop.f32.mrf.mxu0
  %182 = vmatprep.mubr.f32.mxu0 0.0
  %183 = vmatmul.mubr.f32.gmra.mxu0 %v93
  %v184 = vpop.f32.mrf.mxu0
  %v185 = vadd.f32 0.0, %v184
  %v186 = vpop.f32.mrf.mxu0
  %187 = vmatprep.mubr.f32.mxu0 0.0
  %188 = vmatmul.mubr.f32.gmra.mxu0 %v96
  %v189 = vpop.f32.mrf.mxu0
  %v190 = vadd.f32 0.0, %v189
  %v191 = vpop.f32.mrf.mxu0
  %192 = vmatprep.mubr.f32.mxu0 0.0
  %193 = vmatmul.mubr.f32.gmra.mxu0 %v99
  %v194 = vpop.f32.mrf.mxu0
  %v195 = vadd.f32 0.0, %v194
  %v196 = vpop.f32.mrf.mxu0
  %197 = vmatprep.mubr.f32.mxu0 0.0
  %198 = vmatmul.mubr.f32.gmra.mxu0 %v102
  %v199 = vpop.f32.mrf.mxu0
  %v200 = vadd.f32 0.0, %v199
  %v201 = vpop.f32.mrf.mxu0
  %202 = vmatprep.mubr.f32.mxu0 0.0
  %203 = vmatmul.mubr.f32.gmra.mxu0 %v105
  %v204 = vpop.f32.mrf.mxu0
  %v205 = vadd.f32 0.0, %v204
  %v206 = vpop.f32.mrf.mxu0
  %207 = vmatprep.mubr.f32.mxu0 0.0
  %208 = vmatmul.mubr.f32.gmra.mxu0 %v108
  %v209 = vpop.f32.mrf.mxu0
  %v210 = vadd.f32 0.0, %v209
  %v211 = vpop.f32.mrf.mxu0
  %212 = vmatprep.mubr.f32.mxu0 0.0
  %213 = vmatmul.mubr.f32.gmra.mxu0 %v111
  %v214 = vpop.f32.mrf.mxu0
  %v215 = vadd.f32 0.0, %v214
  %v216 = vpop.f32.mrf.mxu0
  %217 = vdwg.mxu0
  %218 = vst [vmem:[#allocation2] sm:$0xff] %v180
  %219 = vst [vmem:[#allocation2 + $0x8] sm:$0xff] %v185
  %220 = vst [vmem:[#allocation2 + $0x10] sm:$0xff] %v190
  %221 = vst [vmem:[#allocation2 + $0x18] sm:$0xff] %v195
  %222 = vst [vmem:[#allocation2 + $0x20] sm:$0xff] %v200
  %223 = vst [vmem:[#allocation2 + $0x28] sm:$0xff] %v205
  %224 = vst [vmem:[#allocation2 + $0x30] sm:$0xff] %v210
  %225 = vst [vmem:[#allocation2 + $0x38] sm:$0xff] %v215
  %v226 = vld [vmem:[%s2] sm:$0xff]
  %v227 = vld [vmem:[%s2 + $0x8] sm:$0xff]
  %v228 = vld [vmem:[%s2 + $0x10] sm:$0xff]
  %v229 = vld [vmem:[%s2 + $0x18] sm:$0xff]
  %v230 = vld [vmem:[#allocation2] sm:$0xff]
  %vm231 = vcmask 261120
  %v233 = vsel %vm231, 0.0, 0
  %235 = vmatprep.subr.mxu0 0.0
  %236 = vmatpush1.msra.mxu0 0.0
  %237 = vmatprep.subr.mxu0 0.0
  %238 = vmatpush1.msra.mxu0 0.0
  %239 = vmatprep.subr.mxu0 0.0
  %240 = vmatpush1.msra.mxu0 0.0
  %241 = vmatprep.subr.mxu0 0.0
  %242 = vmatpush1.msra.mxu0 0.0
  %243 = vmatprep.subr.mxu0 0.0
  %244 = vmatpush1.msra.mxu0 0.0
  %245 = vmatprep.subr.mxu0 0.0
  %246 = vmatpush1.msra.mxu0 0.0
  %247 = vmatprep.subr.mxu0 0.0
  %248 = vmatpush1.msra.mxu0 0.0
  %249 = vmatprep.subr.mxu0 0.0
  %250 = vmatpush1.msra.mxu0 0.0
  %251 = vmatprep.subr.mxu0 0.0
  %252 = vmatpush1.msra.mxu0 0.0
  %253 = vmatprep.subr.mxu0 0.0
  %254 = vmatpush1.msra.mxu0 0.0
  %255 = vmatprep.subr.mxu0 0.0
  %256 = vmatpush1.msra.mxu0 0.0
  %257 = vmatprep.subr.mxu0 0.0
  %258 = vmatpush1.msra.mxu0 0.0
  %259 = vmatprep.subr.mxu0 0.0
  %260 = vmatpush1.msra.mxu0 %v229
  %261 = vmatprep.subr.mxu0 0.0
  %262 = vmatpush1.msra.mxu0 %v228
  %263 = vmatprep.subr.mxu0 0.0
  %264 = vmatpush1.msra.mxu0 %v227
  %265 = vmatprep.subr.mxu0 0.0
  %266 = vmatpush1.msra.mxu0 %v226
  %267 = vmatprep.subr.mxu0 0.0
  %268 = vmatpush2.msra.mxu0 0.0
  %269 = vmatprep.subr.mxu0 0.0
  %270 = vmatpush2.msra.mxu0 0.0
  %271 = vmatprep.subr.mxu0 0.0
  %272 = vmatpush2.msra.mxu0 0.0
  %273 = vmatprep.subr.mxu0 0.0
  %274 = vmatpush2.msra.mxu0 0.0
  %275 = vmatprep.subr.mxu0 0.0
  %276 = vmatpush2.msra.mxu0 0.0
  %277 = vmatprep.subr.mxu0 0.0
  %278 = vmatpush2.msra.mxu0 0.0
  %279 = vmatprep.subr.mxu0 0.0
  %280 = vmatpush2.msra.mxu0 0.0
  %281 = vmatprep.subr.mxu0 0.0
  %282 = vmatpush2.msra.mxu0 0.0
  %283 = vmatprep.subr.mxu0 0.0
  %284 = vmatpush2.msra.mxu0 0.0
  %285 = vmatprep.subr.mxu0 0.0
  %286 = vmatpush2.msra.mxu0 0.0
  %287 = vmatprep.subr.mxu0 0.0
  %288 = vmatpush2.msra.mxu0 0.0
  %289 = vmatprep.subr.mxu0 0.0
  %290 = vmatpush2.msra.mxu0 0.0
  %291 = vmatprep.subr.mxu0 0.0
  %292 = vmatpush2.msra.mxu0 0.0
  %293 = vmatprep.subr.mxu0 0.0
  %294 = vmatpush2.msra.mxu0 0.0
  %295 = vmatprep.subr.mxu0 0.0
  %296 = vmatpush2.msra.mxu0 0.0
  %297 = vmatprep.subr.mxu0 0.0
  %298 = vmatpush2.msra.mxu0 0.0
  %299 = vmatprep.mubr.f32.mxu0 0.0
  %300 = vmatmul.mubr.f32.gmra.mxu0 %v233
  %v301 = vpop.f32.mrf.mxu0
  %v302 = vadd.f32 0.0, %v301
  %v303 = vpop.f32.mrf.mxu0
  %304 = vdwg.mxu0
  %v305 = vadd.f32 %v230, %v302
  %v306 = vxor.u32 %v305, 2147483648
  %v307 = vmul.f32 %v306, 1.442695
  %v308 = vpow.pop %v307
  %v309 = vadd.f32 %v308, 1.0
  %v310 = vrcp.pop %v309
  %v311 = vmul.f32 1.0, %v310
  %v312 = vtanh.pop %v305
  %v313 = vmul.f32 %v311, 0.0
  %315 = vrot.lane.b32.xlu0 %v312, 64
  %v316 = vpop.permute.xlu0 %315
  %v318 = vmul.f32 %v311, %v316
  %320 = vrot.lane.b32.xlu0 %v318, 32
  %v321 = vpop.permute.xlu0 %320
  %v323 = vadd.f32 %v313, %v321
  %v324 = vtanh.pop %v323
  %326 = vrot.lane.b32.xlu0 %v324, 64
  %v327 = vpop.permute.xlu0 %326
  %v329 = vmul.f32 %v311, %v327
  %s330 = scalar_lea.vmem [#allocation2], 8
  %v331 = vld [vmem:[%s330] sm:$0xff]
  %333 = vrot.lane.b32.xlu0 %v329, 32
  %v334 = vpop.permute.xlu0 %333
  %v335 = vsel %vm231, %v334, 0
  %337 = vmatprep.subr.mxu0 0.0
  %338 = vmatpush1.msra.mxu0 0.0
  %339 = vmatprep.subr.mxu0 0.0
  %340 = vmatpush1.msra.mxu0 0.0
  %341 = vmatprep.subr.mxu0 0.0
  %342 = vmatpush1.msra.mxu0 0.0
  %343 = vmatprep.subr.mxu0 0.0
  %344 = vmatpush1.msra.mxu0 0.0
  %345 = vmatprep.subr.mxu0 0.0
  %346 = vmatpush1.msra.mxu0 0.0
  %347 = vmatprep.subr.mxu0 0.0
  %348 = vmatpush1.msra.mxu0 0.0
  %349 = vmatprep.subr.mxu0 0.0
  %350 = vmatpush1.msra.mxu0 0.0
  %351 = vmatprep.subr.mxu0 0.0
  %352 = vmatpush1.msra.mxu0 0.0
  %353 = vmatprep.subr.mxu0 0.0
  %354 = vmatpush1.msra.mxu0 0.0
  %355 = vmatprep.subr.mxu0 0.0
  %356 = vmatpush1.msra.mxu0 0.0
  %357 = vmatprep.subr.mxu0 0.0
  %358 = vmatpush1.msra.mxu0 0.0
  %359 = vmatprep.subr.mxu0 0.0
  %360 = vmatpush1.msra.mxu0 0.0
  %361 = vmatprep.subr.mxu0 0.0
  %362 = vmatpush1.msra.mxu0 %v229
  %363 = vmatprep.subr.mxu0 0.0
  %364 = vmatpush1.msra.mxu0 %v228
  %365 = vmatprep.subr.mxu0 0.0
  %366 = vmatpush1.msra.mxu0 %v227
  %367 = vmatprep.subr.mxu0 0.0
  %368 = vmatpush1.msra.mxu0 %v226
  %369 = vmatprep.subr.mxu0 0.0
  %370 = vmatpush2.msra.mxu0 0.0
  %371 = vmatprep.subr.mxu0 0.0
  %372 = vmatpush2.msra.mxu0 0.0
  %373 = vmatprep.subr.mxu0 0.0
  %374 = vmatpush2.msra.mxu0 0.0
  %375 = vmatprep.subr.mxu0 0.0
  %376 = vmatpush2.msra.mxu0 0.0
  %377 = vmatprep.subr.mxu0 0.0
  %378 = vmatpush2.msra.mxu0 0.0
  %379 = vmatprep.subr.mxu0 0.0
  %380 = vmatpush2.msra.mxu0 0.0
  %381 = vmatprep.subr.mxu0 0.0
  %382 = vmatpush2.msra.mxu0 0.0
  %383 = vmatprep.subr.mxu0 0.0
  %384 = vmatpush2.msra.mxu0 0.0
  %385 = vmatprep.subr.mxu0 0.0
  %386 = vmatpush2.msra.mxu0 0.0
  %387 = vmatprep.subr.mxu0 0.0
  %388 = vmatpush2.msra.mxu0 0.0
  %389 = vmatprep.subr.mxu0 0.0
  %390 = vmatpush2.msra.mxu0 0.0
  %391 = vmatprep.subr.mxu0 0.0
  %392 = vmatpush2.msra.mxu0 0.0
  %393 = vmatprep.subr.mxu0 0.0
  %394 = vmatpush2.msra.mxu0 0.0
  %395 = vmatprep.subr.mxu0 0.0
  %396 = vmatpush2.msra.mxu0 0.0
  %397 = vmatprep.subr.mxu0 0.0
  %398 = vmatpush2.msra.mxu0 0.0
  %399 = vmatprep.subr.mxu0 0.0
  %400 = vmatpush2.msra.mxu0 0.0
  %401 = vmatprep.mubr.f32.mxu0 0.0
  %402 = vmatmul.mubr.f32.gmra.mxu0 %v335
  %v403 = vpop.f32.mrf.mxu0
  %v404 = vadd.f32 0.0, %v403
  %v405 = vpop.f32.mrf.mxu0
  %406 = vdwg.mxu0
  %v407 = vadd.f32 %v331, %v404
  %v408 = vxor.u32 %v407, 2147483648
  %v409 = vmul.f32 %v408, 1.442695
  %v410 = vpow.pop %v409
  %v411 = vadd.f32 %v410, 1.0
  %v412 = vrcp.pop %v411
  %v413 = vmul.f32 1.0, %v412
  %v414 = vtanh.pop %v407
  %v415 = vmul.f32 %v413, %v323
  %417 = vrot.lane.b32.xlu0 %v414, 64
  %v418 = vpop.permute.xlu0 %417
  %v420 = vmul.f32 %v413, %v418
  %422 = vrot.lane.b32.xlu0 %v420, 32
  %v423 = vpop.permute.xlu0 %422
  %v425 = vadd.f32 %v415, %v423
  %v426 = vtanh.pop %v425
  %428 = vrot.lane.b32.xlu0 %v426, 64
  %v429 = vpop.permute.xlu0 %428
  %v431 = vmul.f32 %v413, %v429
  %s432 = scalar_lea.vmem [#allocation2], 16
  %v433 = vld [vmem:[%s432] sm:$0xff]
  %435 = vrot.lane.b32.xlu0 %v431, 32
  %v436 = vpop.permute.xlu0 %435
  %v437 = vsel %vm231, %v436, 0
  %439 = vmatprep.subr.mxu0 0.0
  %440 = vmatpush1.msra.mxu0 0.0
  %441 = vmatprep.subr.mxu0 0.0
  %442 = vmatpush1.msra.mxu0 0.0
  %443 = vmatprep.subr.mxu0 0.0
  %444 = vmatpush1.msra.mxu0 0.0
  %445 = vmatprep.subr.mxu0 0.0
  %446 = vmatpush1.msra.mxu0 0.0
  %447 = vmatprep.subr.mxu0 0.0
  %448 = vmatpush1.msra.mxu0 0.0
  %449 = vmatprep.subr.mxu0 0.0
  %450 = vmatpush1.msra.mxu0 0.0
  %451 = vmatprep.subr.mxu0 0.0
  %452 = vmatpush1.msra.mxu0 0.0
  %453 = vmatprep.subr.mxu0 0.0
  %454 = vmatpush1.msra.mxu0 0.0
  %455 = vmatprep.subr.mxu0 0.0
  %456 = vmatpush1.msra.mxu0 0.0
  %457 = vmatprep.subr.mxu0 0.0
  %458 = vmatpush1.msra.mxu0 0.0
  %459 = vmatprep.subr.mxu0 0.0
  %460 = vmatpush1.msra.mxu0 0.0
  %461 = vmatprep.subr.mxu0 0.0
  %462 = vmatpush1.msra.mxu0 0.0
  %463 = vmatprep.subr.mxu0 0.0
  %464 = vmatpush1.msra.mxu0 %v229
  %465 = vmatprep.subr.mxu0 0.0
  %466 = vmatpush1.msra.mxu0 %v228
  %467 = vmatprep.subr.mxu0 0.0
  %468 = vmatpush1.msra.mxu0 %v227
  %469 = vmatprep.subr.mxu0 0.0
  %470 = vmatpush1.msra.mxu0 %v226
  %471 = vmatprep.subr.mxu0 0.0
  %472 = vmatpush2.msra.mxu0 0.0
  %473 = vmatprep.subr.mxu0 0.0
  %474 = vmatpush2.msra.mxu0 0.0
  %475 = vmatprep.subr.mxu0 0.0
  %476 = vmatpush2.msra.mxu0 0.0
  %477 = vmatprep.subr.mxu0 0.0
  %478 = vmatpush2.msra.mxu0 0.0
  %479 = vmatprep.subr.mxu0 0.0
  %480 = vmatpush2.msra.mxu0 0.0
  %481 = vmatprep.subr.mxu0 0.0
  %482 = vmatpush2.msra.mxu0 0.0
  %483 = vmatprep.subr.mxu0 0.0
  %484 = vmatpush2.msra.mxu0 0.0
  %485 = vmatprep.subr.mxu0 0.0
  %486 = vmatpush2.msra.mxu0 0.0
  %487 = vmatprep.subr.mxu0 0.0
  %488 = vmatpush2.msra.mxu0 0.0
  %489 = vmatprep.subr.mxu0 0.0
  %490 = vmatpush2.msra.mxu0 0.0
  %491 = vmatprep.subr.mxu0 0.0
  %492 = vmatpush2.msra.mxu0 0.0
  %493 = vmatprep.subr.mxu0 0.0
  %494 = vmatpush2.msra.mxu0 0.0
  %495 = vmatprep.subr.mxu0 0.0
  %496 = vmatpush2.msra.mxu0 0.0
  %497 = vmatprep.subr.mxu0 0.0
  %498 = vmatpush2.msra.mxu0 0.0
  %499 = vmatprep.subr.mxu0 0.0
  %500 = vmatpush2.msra.mxu0 0.0
  %501 = vmatprep.subr.mxu0 0.0
  %502 = vmatpush2.msra.mxu0 0.0
  %503 = vmatprep.mubr.f32.mxu0 0.0
  %504 = vmatmul.mubr.f32.gmra.mxu0 %v437
  %v505 = vpop.f32.mrf.mxu0
  %v506 = vadd.f32 0.0, %v505
  %v507 = vpop.f32.mrf.mxu0
  %508 = vdwg.mxu0
  %v509 = vadd.f32 %v433, %v506
  %v510 = vxor.u32 %v509, 2147483648
  %v511 = vmul.f32 %v510, 1.442695
  %v512 = vpow.pop %v511
  %v513 = vadd.f32 %v512, 1.0
  %v514 = vrcp.pop %v513
  %v515 = vmul.f32 1.0, %v514
  %v516 = vtanh.pop %v509
  %v517 = vmul.f32 %v515, %v425
  %519 = vrot.lane.b32.xlu0 %v516, 64
  %v520 = vpop.permute.xlu0 %519
  %v522 = vmul.f32 %v515, %v520
  %524 = vrot.lane.b32.xlu0 %v522, 32
  %v525 = vpop.permute.xlu0 %524
  %v527 = vadd.f32 %v517, %v525
  %v528 = vtanh.pop %v527
  %530 = vrot.lane.b32.xlu0 %v528, 64
  %v531 = vpop.permute.xlu0 %530
  %v533 = vmul.f32 %v515, %v531
  %s534 = scalar_lea.vmem [#allocation2], 24
  %v535 = vld [vmem:[%s534] sm:$0xff]
  %537 = vrot.lane.b32.xlu0 %v533, 32
  %v538 = vpop.permute.xlu0 %537
  %v539 = vsel %vm231, %v538, 0
  %541 = vmatprep.subr.mxu0 0.0
  %542 = vmatpush1.msra.mxu0 0.0
  %543 = vmatprep.subr.mxu0 0.0
  %544 = vmatpush1.msra.mxu0 0.0
  %545 = vmatprep.subr.mxu0 0.0
  %546 = vmatpush1.msra.mxu0 0.0
  %547 = vmatprep.subr.mxu0 0.0
  %548 = vmatpush1.msra.mxu0 0.0
  %549 = vmatprep.subr.mxu0 0.0
  %550 = vmatpush1.msra.mxu0 0.0
  %551 = vmatprep.subr.mxu0 0.0
  %552 = vmatpush1.msra.mxu0 0.0
  %553 = vmatprep.subr.mxu0 0.0
  %554 = vmatpush1.msra.mxu0 0.0
  %555 = vmatprep.subr.mxu0 0.0
  %556 = vmatpush1.msra.mxu0 0.0
  %557 = vmatprep.subr.mxu0 0.0
  %558 = vmatpush1.msra.mxu0 0.0
  %559 = vmatprep.subr.mxu0 0.0
  %560 = vmatpush1.msra.mxu0 0.0
  %561 = vmatprep.subr.mxu0 0.0
  %562 = vmatpush1.msra.mxu0 0.0
  %563 = vmatprep.subr.mxu0 0.0
  %564 = vmatpush1.msra.mxu0 0.0
  %565 = vmatprep.subr.mxu0 0.0
  %566 = vmatpush1.msra.mxu0 %v229
  %567 = vmatprep.subr.mxu0 0.0
  %568 = vmatpush1.msra.mxu0 %v228
  %569 = vmatprep.subr.mxu0 0.0
  %570 = vmatpush1.msra.mxu0 %v227
  %571 = vmatprep.subr.mxu0 0.0
  %572 = vmatpush1.msra.mxu0 %v226
  %573 = vmatprep.subr.mxu0 0.0
  %574 = vmatpush2.msra.mxu0 0.0
  %575 = vmatprep.subr.mxu0 0.0
  %576 = vmatpush2.msra.mxu0 0.0
  %577 = vmatprep.subr.mxu0 0.0
  %578 = vmatpush2.msra.mxu0 0.0
  %579 = vmatprep.subr.mxu0 0.0
  %580 = vmatpush2.msra.mxu0 0.0
  %581 = vmatprep.subr.mxu0 0.0
  %582 = vmatpush2.msra.mxu0 0.0
  %583 = vmatprep.subr.mxu0 0.0
  %584 = vmatpush2.msra.mxu0 0.0
  %585 = vmatprep.subr.mxu0 0.0
  %586 = vmatpush2.msra.mxu0 0.0
  %587 = vmatprep.subr.mxu0 0.0
  %588 = vmatpush2.msra.mxu0 0.0
  %589 = vmatprep.subr.mxu0 0.0
  %590 = vmatpush2.msra.mxu0 0.0
  %591 = vmatprep.subr.mxu0 0.0
  %592 = vmatpush2.msra.mxu0 0.0
  %593 = vmatprep.subr.mxu0 0.0
  %594 = vmatpush2.msra.mxu0 0.0
  %595 = vmatprep.subr.mxu0 0.0
  %596 = vmatpush2.msra.mxu0 0.0
  %597 = vmatprep.subr.mxu0 0.0
  %598 = vmatpush2.msra.mxu0 0.0
  %599 = vmatprep.subr.mxu0 0.0
  %600 = vmatpush2.msra.mxu0 0.0
  %601 = vmatprep.subr.mxu0 0.0
  %602 = vmatpush2.msra.mxu0 0.0
  %603 = vmatprep.subr.mxu0 0.0
  %604 = vmatpush2.msra.mxu0 0.0
  %605 = vmatprep.mubr.f32.mxu0 0.0
  %606 = vmatmul.mubr.f32.gmra.mxu0 %v539
  %v607 = vpop.f32.mrf.mxu0
  %v608 = vadd.f32 0.0, %v607
  %v609 = vpop.f32.mrf.mxu0
  %610 = vdwg.mxu0
  %v611 = vadd.f32 %v535, %v608
  %v612 = vxor.u32 %v611, 2147483648
  %v613 = vmul.f32 %v612, 1.442695
  %v614 = vpow.pop %v613
  %v615 = vadd.f32 %v614, 1.0
  %v616 = vrcp.pop %v615
  %v617 = vmul.f32 1.0, %v616
  %v618 = vtanh.pop %v611
  %v619 = vmul.f32 %v617, %v527
  %621 = vrot.lane.b32.xlu0 %v618, 64
  %v622 = vpop.permute.xlu0 %621
  %v624 = vmul.f32 %v617, %v622
  %626 = vrot.lane.b32.xlu0 %v624, 32
  %v627 = vpop.permute.xlu0 %626
  %v629 = vadd.f32 %v619, %v627
  %v630 = vtanh.pop %v629
  %632 = vrot.lane.b32.xlu0 %v630, 64
  %v633 = vpop.permute.xlu0 %632
  %v635 = vmul.f32 %v617, %v633
  %s636 = scalar_lea.vmem [#allocation2], 32
  %v637 = vld [vmem:[%s636] sm:$0xff]
  %639 = vrot.lane.b32.xlu0 %v635, 32
  %v640 = vpop.permute.xlu0 %639
  %v641 = vsel %vm231, %v640, 0
  %643 = vmatprep.subr.mxu0 0.0
  %644 = vmatpush1.msra.mxu0 0.0
  %645 = vmatprep.subr.mxu0 0.0
  %646 = vmatpush1.msra.mxu0 0.0
  %647 = vmatprep.subr.mxu0 0.0
  %648 = vmatpush1.msra.mxu0 0.0
  %649 = vmatprep.subr.mxu0 0.0
  %650 = vmatpush1.msra.mxu0 0.0
  %651 = vmatprep.subr.mxu0 0.0
  %652 = vmatpush1.msra.mxu0 0.0
  %653 = vmatprep.subr.mxu0 0.0
  %654 = vmatpush1.msra.mxu0 0.0
  %655 = vmatprep.subr.mxu0 0.0
  %656 = vmatpush1.msra.mxu0 0.0
  %657 = vmatprep.subr.mxu0 0.0
  %658 = vmatpush1.msra.mxu0 0.0
  %659 = vmatprep.subr.mxu0 0.0
  %660 = vmatpush1.msra.mxu0 0.0
  %661 = vmatprep.subr.mxu0 0.0
  %662 = vmatpush1.msra.mxu0 0.0
  %663 = vmatprep.subr.mxu0 0.0
  %664 = vmatpush1.msra.mxu0 0.0
  %665 = vmatprep.subr.mxu0 0.0
  %666 = vmatpush1.msra.mxu0 0.0
  %667 = vmatprep.subr.mxu0 0.0
  %668 = vmatpush1.msra.mxu0 %v229
  %669 = vmatprep.subr.mxu0 0.0
  %670 = vmatpush1.msra.mxu0 %v228
  %671 = vmatprep.subr.mxu0 0.0
  %672 = vmatpush1.msra.mxu0 %v227
  %673 = vmatprep.subr.mxu0 0.0
  %674 = vmatpush1.msra.mxu0 %v226
  %675 = vmatprep.subr.mxu0 0.0
  %676 = vmatpush2.msra.mxu0 0.0
  %677 = vmatprep.subr.mxu0 0.0
  %678 = vmatpush2.msra.mxu0 0.0
  %679 = vmatprep.subr.mxu0 0.0
  %680 = vmatpush2.msra.mxu0 0.0
  %681 = vmatprep.subr.mxu0 0.0
  %682 = vmatpush2.msra.mxu0 0.0
  %683 = vmatprep.subr.mxu0 0.0
  %684 = vmatpush2.msra.mxu0 0.0
  %685 = vmatprep.subr.mxu0 0.0
  %686 = vmatpush2.msra.mxu0 0.0
  %687 = vmatprep.subr.mxu0 0.0
  %688 = vmatpush2.msra.mxu0 0.0
  %689 = vmatprep.subr.mxu0 0.0
  %690 = vmatpush2.msra.mxu0 0.0
  %691 = vmatprep.subr.mxu0 0.0
  %692 = vmatpush2.msra.mxu0 0.0
  %693 = vmatprep.subr.mxu0 0.0
  %694 = vmatpush2.msra.mxu0 0.0
  %695 = vmatprep.subr.mxu0 0.0
  %696 = vmatpush2.msra.mxu0 0.0
  %697 = vmatprep.subr.mxu0 0.0
  %698 = vmatpush2.msra.mxu0 0.0
  %699 = vmatprep.subr.mxu0 0.0
  %700 = vmatpush2.msra.mxu0 0.0
  %701 = vmatprep.subr.mxu0 0.0
  %702 = vmatpush2.msra.mxu0 0.0
  %703 = vmatprep.subr.mxu0 0.0
  %704 = vmatpush2.msra.mxu0 0.0
  %705 = vmatprep.subr.mxu0 0.0
  %706 = vmatpush2.msra.mxu0 0.0
  %707 = vmatprep.mubr.f32.mxu0 0.0
  %708 = vmatmul.mubr.f32.gmra.mxu0 %v641
  %v709 = vpop.f32.mrf.mxu0
  %v710 = vadd.f32 0.0, %v709
  %v711 = vpop.f32.mrf.mxu0
  %712 = vdwg.mxu0
  %v713 = vadd.f32 %v637, %v710
  %v714 = vxor.u32 %v713, 2147483648
  %v715 = vmul.f32 %v714, 1.442695
  %v716 = vpow.pop %v715
  %v717 = vadd.f32 %v716, 1.0
  %v718 = vrcp.pop %v717
  %v719 = vmul.f32 1.0, %v718
  %v720 = vtanh.pop %v713
  %v721 = vmul.f32 %v719, %v629
  %723 = vrot.lane.b32.xlu0 %v720, 64
  %v724 = vpop.permute.xlu0 %723
  %v726 = vmul.f32 %v719, %v724
  %728 = vrot.lane.b32.xlu0 %v726, 32
  %v729 = vpop.permute.xlu0 %728
  %v731 = vadd.f32 %v721, %v729
  %v732 = vtanh.pop %v731
  %734 = vrot.lane.b32.xlu0 %v732, 64
  %v735 = vpop.permute.xlu0 %734
  %v737 = vmul.f32 %v719, %v735
  %s738 = scalar_lea.vmem [#allocation2], 40
  %v739 = vld [vmem:[%s738] sm:$0xff]
  %741 = vrot.lane.b32.xlu0 %v737, 32
  %v742 = vpop.permute.xlu0 %741
  %v743 = vsel %vm231, %v742, 0
  %745 = vmatprep.subr.mxu0 0.0
  %746 = vmatpush1.msra.mxu0 0.0
  %747 = vmatprep.subr.mxu0 0.0
  %748 = vmatpush1.msra.mxu0 0.0
  %749 = vmatprep.subr.mxu0 0.0
  %750 = vmatpush1.msra.mxu0 0.0
  %751 = vmatprep.subr.mxu0 0.0
  %752 = vmatpush1.msra.mxu0 0.0
  %753 = vmatprep.subr.mxu0 0.0
  %754 = vmatpush1.msra.mxu0 0.0
  %755 = vmatprep.subr.mxu0 0.0
  %756 = vmatpush1.msra.mxu0 0.0
  %757 = vmatprep.subr.mxu0 0.0
  %758 = vmatpush1.msra.mxu0 0.0
  %759 = vmatprep.subr.mxu0 0.0
  %760 = vmatpush1.msra.mxu0 0.0
  %761 = vmatprep.subr.mxu0 0.0
  %762 = vmatpush1.msra.mxu0 0.0
  %763 = vmatprep.subr.mxu0 0.0
  %764 = vmatpush1.msra.mxu0 0.0
  %765 = vmatprep.subr.mxu0 0.0
  %766 = vmatpush1.msra.mxu0 0.0
  %767 = vmatprep.subr.mxu0 0.0
  %768 = vmatpush1.msra.mxu0 0.0
  %769 = vmatprep.subr.mxu0 0.0
  %770 = vmatpush1.msra.mxu0 %v229
  %771 = vmatprep.subr.mxu0 0.0
  %772 = vmatpush1.msra.mxu0 %v228
  %773 = vmatprep.subr.mxu0 0.0
  %774 = vmatpush1.msra.mxu0 %v227
  %775 = vmatprep.subr.mxu0 0.0
  %776 = vmatpush1.msra.mxu0 %v226
  %777 = vmatprep.subr.mxu0 0.0
  %778 = vmatpush2.msra.mxu0 0.0
  %779 = vmatprep.subr.mxu0 0.0
  %780 = vmatpush2.msra.mxu0 0.0
  %781 = vmatprep.subr.mxu0 0.0
  %782 = vmatpush2.msra.mxu0 0.0
  %783 = vmatprep.subr.mxu0 0.0
  %784 = vmatpush2.msra.mxu0 0.0
  %785 = vmatprep.subr.mxu0 0.0
  %786 = vmatpush2.msra.mxu0 0.0
  %787 = vmatprep.subr.mxu0 0.0
  %788 = vmatpush2.msra.mxu0 0.0
  %789 = vmatprep.subr.mxu0 0.0
  %790 = vmatpush2.msra.mxu0 0.0
  %791 = vmatprep.subr.mxu0 0.0
  %792 = vmatpush2.msra.mxu0 0.0
  %793 = vmatprep.subr.mxu0 0.0
  %794 = vmatpush2.msra.mxu0 0.0
  %795 = vmatprep.subr.mxu0 0.0
  %796 = vmatpush2.msra.mxu0 0.0
  %797 = vmatprep.subr.mxu0 0.0
  %798 = vmatpush2.msra.mxu0 0.0
  %799 = vmatprep.subr.mxu0 0.0
  %800 = vmatpush2.msra.mxu0 0.0
  %801 = vmatprep.subr.mxu0 0.0
  %802 = vmatpush2.msra.mxu0 0.0
  %803 = vmatprep.subr.mxu0 0.0
  %804 = vmatpush2.msra.mxu0 0.0
  %805 = vmatprep.subr.mxu0 0.0
  %806 = vmatpush2.msra.mxu0 0.0
  %807 = vmatprep.subr.mxu0 0.0
  %808 = vmatpush2.msra.mxu0 0.0
  %809 = vmatprep.mubr.f32.mxu0 0.0
  %810 = vmatmul.mubr.f32.gmra.mxu0 %v743
  %v811 = vpop.f32.mrf.mxu0
  %v812 = vadd.f32 0.0, %v811
  %v813 = vpop.f32.mrf.mxu0
  %814 = vdwg.mxu0
  %v815 = vadd.f32 %v739, %v812
  %v816 = vxor.u32 %v815, 2147483648
  %v817 = vmul.f32 %v816, 1.442695
  %v818 = vpow.pop %v817
  %v819 = vadd.f32 %v818, 1.0
  %v820 = vrcp.pop %v819
  %v821 = vmul.f32 1.0, %v820
  %v822 = vtanh.pop %v815
  %v823 = vmul.f32 %v821, %v731
  %825 = vrot.lane.b32.xlu0 %v822, 64
  %v826 = vpop.permute.xlu0 %825
  %v828 = vmul.f32 %v821, %v826
  %830 = vrot.lane.b32.xlu0 %v828, 32
  %v831 = vpop.permute.xlu0 %830
  %v833 = vadd.f32 %v823, %v831
  %v834 = vtanh.pop %v833
  %836 = vrot.lane.b32.xlu0 %v834, 64
  %v837 = vpop.permute.xlu0 %836
  %v839 = vmul.f32 %v821, %v837
  %s840 = scalar_lea.vmem [#allocation2], 48
  %v841 = vld [vmem:[%s840] sm:$0xff]
  %843 = vrot.lane.b32.xlu0 %v839, 32
  %v844 = vpop.permute.xlu0 %843
  %v845 = vsel %vm231, %v844, 0
  %847 = vmatprep.subr.mxu0 0.0
  %848 = vmatpush1.msra.mxu0 0.0
  %849 = vmatprep.subr.mxu0 0.0
  %850 = vmatpush1.msra.mxu0 0.0
  %851 = vmatprep.subr.mxu0 0.0
  %852 = vmatpush1.msra.mxu0 0.0
  %853 = vmatprep.subr.mxu0 0.0
  %854 = vmatpush1.msra.mxu0 0.0
  %855 = vmatprep.subr.mxu0 0.0
  %856 = vmatpush1.msra.mxu0 0.0
  %857 = vmatprep.subr.mxu0 0.0
  %858 = vmatpush1.msra.mxu0 0.0
  %859 = vmatprep.subr.mxu0 0.0
  %860 = vmatpush1.msra.mxu0 0.0
  %861 = vmatprep.subr.mxu0 0.0
  %862 = vmatpush1.msra.mxu0 0.0
  %863 = vmatprep.subr.mxu0 0.0
  %864 = vmatpush1.msra.mxu0 0.0
  %865 = vmatprep.subr.mxu0 0.0
  %866 = vmatpush1.msra.mxu0 0.0
  %867 = vmatprep.subr.mxu0 0.0
  %868 = vmatpush1.msra.mxu0 0.0
  %869 = vmatprep.subr.mxu0 0.0
  %870 = vmatpush1.msra.mxu0 0.0
  %871 = vmatprep.subr.mxu0 0.0
  %872 = vmatpush1.msra.mxu0 %v229
  %873 = vmatprep.subr.mxu0 0.0
  %874 = vmatpush1.msra.mxu0 %v228
  %875 = vmatprep.subr.mxu0 0.0
  %876 = vmatpush1.msra.mxu0 %v227
  %877 = vmatprep.subr.mxu0 0.0
  %878 = vmatpush1.msra.mxu0 %v226
  %879 = vmatprep.subr.mxu0 0.0
  %880 = vmatpush2.msra.mxu0 0.0
  %881 = vmatprep.subr.mxu0 0.0
  %882 = vmatpush2.msra.mxu0 0.0
  %883 = vmatprep.subr.mxu0 0.0
  %884 = vmatpush2.msra.mxu0 0.0
  %885 = vmatprep.subr.mxu0 0.0
  %886 = vmatpush2.msra.mxu0 0.0
  %887 = vmatprep.subr.mxu0 0.0
  %888 = vmatpush2.msra.mxu0 0.0
  %889 = vmatprep.subr.mxu0 0.0
  %890 = vmatpush2.msra.mxu0 0.0
  %891 = vmatprep.subr.mxu0 0.0
  %892 = vmatpush2.msra.mxu0 0.0
  %893 = vmatprep.subr.mxu0 0.0
  %894 = vmatpush2.msra.mxu0 0.0
  %895 = vmatprep.subr.mxu0 0.0
  %896 = vmatpush2.msra.mxu0 0.0
  %897 = vmatprep.subr.mxu0 0.0
  %898 = vmatpush2.msra.mxu0 0.0
  %899 = vmatprep.subr.mxu0 0.0
  %900 = vmatpush2.msra.mxu0 0.0
  %901 = vmatprep.subr.mxu0 0.0
  %902 = vmatpush2.msra.mxu0 0.0
  %903 = vmatprep.subr.mxu0 0.0
  %904 = vmatpush2.msra.mxu0 0.0
  %905 = vmatprep.subr.mxu0 0.0
  %906 = vmatpush2.msra.mxu0 0.0
  %907 = vmatprep.subr.mxu0 0.0
  %908 = vmatpush2.msra.mxu0 0.0
  %909 = vmatprep.subr.mxu0 0.0
  %910 = vmatpush2.msra.mxu0 0.0
  %911 = vmatprep.mubr.f32.mxu0 0.0
  %912 = vmatmul.mubr.f32.gmra.mxu0 %v845
  %v913 = vpop.f32.mrf.mxu0
  %v914 = vadd.f32 0.0, %v913
  %v915 = vpop.f32.mrf.mxu0
  %916 = vdwg.mxu0
  %v917 = vadd.f32 %v841, %v914
  %v918 = vxor.u32 %v917, 2147483648
  %v919 = vmul.f32 %v918, 1.442695
  %v920 = vpow.pop %v919
  %v921 = vadd.f32 %v920, 1.0
  %v922 = vrcp.pop %v921
  %v923 = vmul.f32 1.0, %v922
  %v924 = vtanh.pop %v917
  %v925 = vmul.f32 %v923, %v833
  %927 = vrot.lane.b32.xlu0 %v924, 64
  %v928 = vpop.permute.xlu0 %927
  %v930 = vmul.f32 %v923, %v928
  %932 = vrot.lane.b32.xlu0 %v930, 32
  %v933 = vpop.permute.xlu0 %932
  %v935 = vadd.f32 %v925, %v933
  %v936 = vtanh.pop %v935
  %938 = vrot.lane.b32.xlu0 %v936, 64
  %v939 = vpop.permute.xlu0 %938
  %v941 = vmul.f32 %v923, %v939
  %s942 = scalar_lea.vmem [#allocation2], 56
  %v943 = vld [vmem:[%s942] sm:$0xff]
  %945 = vrot.lane.b32.xlu0 %v941, 32
  %v946 = vpop.permute.xlu0 %945
  %v947 = vsel %vm231, %v946, 0
  %949 = vmatprep.subr.mxu0 0.0
  %950 = vmatpush1.msra.mxu0 0.0
  %951 = vmatprep.subr.mxu0 0.0
  %952 = vmatpush1.msra.mxu0 0.0
  %953 = vmatprep.subr.mxu0 0.0
  %954 = vmatpush1.msra.mxu0 0.0
  %955 = vmatprep.subr.mxu0 0.0
  %956 = vmatpush1.msra.mxu0 0.0
  %957 = vmatprep.subr.mxu0 0.0
  %958 = vmatpush1.msra.mxu0 0.0
  %959 = vmatprep.subr.mxu0 0.0
  %960 = vmatpush1.msra.mxu0 0.0
  %961 = vmatprep.subr.mxu0 0.0
  %962 = vmatpush1.msra.mxu0 0.0
  %963 = vmatprep.subr.mxu0 0.0
  %964 = vmatpush1.msra.mxu0 0.0
  %965 = vmatprep.subr.mxu0 0.0
  %966 = vmatpush1.msra.mxu0 0.0
  %967 = vmatprep.subr.mxu0 0.0
  %968 = vmatpush1.msra.mxu0 0.0
  %969 = vmatprep.subr.mxu0 0.0
  %970 = vmatpush1.msra.mxu0 0.0
  %971 = vmatprep.subr.mxu0 0.0
  %972 = vmatpush1.msra.mxu0 0.0
  %973 = vmatprep.subr.mxu0 0.0
  %974 = vmatpush1.msra.mxu0 %v229
  %975 = vmatprep.subr.mxu0 0.0
  %976 = vmatpush1.msra.mxu0 %v228
  %977 = vmatprep.subr.mxu0 0.0
  %978 = vmatpush1.msra.mxu0 %v227
  %979 = vmatprep.subr.mxu0 0.0
  %980 = vmatpush1.msra.mxu0 %v226
  %981 = vmatprep.subr.mxu0 0.0
  %982 = vmatpush2.msra.mxu0 0.0
  %983 = vmatprep.subr.mxu0 0.0
  %984 = vmatpush2.msra.mxu0 0.0
  %985 = vmatprep.subr.mxu0 0.0
  %986 = vmatpush2.msra.mxu0 0.0
  %987 = vmatprep.subr.mxu0 0.0
  %988 = vmatpush2.msra.mxu0 0.0
  %989 = vmatprep.subr.mxu0 0.0
  %990 = vmatpush2.msra.mxu0 0.0
  %991 = vmatprep.subr.mxu0 0.0
  %992 = vmatpush2.msra.mxu0 0.0
  %993 = vmatprep.subr.mxu0 0.0
  %994 = vmatpush2.msra.mxu0 0.0
  %995 = vmatprep.subr.mxu0 0.0
  %996 = vmatpush2.msra.mxu0 0.0
  %997 = vmatprep.subr.mxu0 0.0
  %998 = vmatpush2.msra.mxu0 0.0
  %999 = vmatprep.subr.mxu0 0.0
  %1000 = vmatpush2.msra.mxu0 0.0
  %1001 = vmatprep.subr.mxu0 0.0
  %1002 = vmatpush2.msra.mxu0 0.0
  %1003 = vmatprep.subr.mxu0 0.0
  %1004 = vmatpush2.msra.mxu0 0.0
  %1005 = vmatprep.subr.mxu0 0.0
  %1006 = vmatpush2.msra.mxu0 0.0
  %1007 = vmatprep.subr.mxu0 0.0
  %1008 = vmatpush2.msra.mxu0 0.0
  %1009 = vmatprep.subr.mxu0 0.0
  %1010 = vmatpush2.msra.mxu0 0.0
  %1011 = vmatprep.subr.mxu0 0.0
  %1012 = vmatpush2.msra.mxu0 0.0
  %1013 = vmatprep.mubr.f32.mxu0 0.0
  %1014 = vmatmul.mubr.f32.gmra.mxu0 %v947
  %v1015 = vpop.f32.mrf.mxu0
  %v1016 = vadd.f32 0.0, %v1015
  %v1017 = vpop.f32.mrf.mxu0
  %1018 = vdwg.mxu0
  %v1019 = vadd.f32 %v943, %v1016
  %v1020 = vxor.u32 %v1019, 2147483648
  %v1021 = vmul.f32 %v1020, 1.442695
  %v1022 = vpow.pop %v1021
  %v1023 = vadd.f32 %v1022, 1.0
  %v1024 = vrcp.pop %v1023
  %v1025 = vmul.f32 1.0, %v1024
  %v1026 = vtanh.pop %v1019
  %v1027 = vmul.f32 %v1025, %v935
  %1029 = vrot.lane.b32.xlu0 %v1026, 64
  %v1030 = vpop.permute.xlu0 %1029
  %v1032 = vmul.f32 %v1025, %v1030
  %1034 = vrot.lane.b32.xlu0 %v1032, 32
  %v1035 = vpop.permute.xlu0 %1034
  %v1037 = vadd.f32 %v1027, %v1035
  %v1038 = vtanh.pop %v1037
  %1040 = vrot.lane.b32.xlu0 %v1038, 64
  %v1041 = vpop.permute.xlu0 %1040
  %v1043 = vmul.f32 %v1025, %v1041
  %v1044 = vld [vmem:[%s3] sm:$0x1]
  %v1046 = vlaneseq
  %v1047 = vshrl.u32 %v1046, 7
  %v1048 = vsub.s32 0, %v1047
  %v1049 = vrot.slane %v1044, %v1048
  %1050 = vrot.lane.b32.xlu0 %v1049, 96
  %v1051 = vpop.permute.xlu0 %1050
  %v1053 = vmul.f32 %v1043, %v1051
  %1055 = vrot.lane.b32.xlu0 %v1053, 32
  %v1056 = vpop.permute.xlu0 %1055
  %v1058 = vsel %vm231, %v1056, 0.0
  %1059 = vadd.xlane.f32.xlu0 %v1058
  %v1060 = vpop.xlane.xlu0 %1059
  %v1061 = vld [vmem:[#allocation3] sm:$0x1]
  %v1063 = vlaneseq
  %v1064 = vshrl.u32 %v1063, 7
  %v1065 = vsub.s32 0, %v1064
  %v1066 = vrot.slane %v1061, %v1065
  %v1068 = vadd.f32 %v1060, %v1066
  %vm1069 = vcmask 7168
  %1070 = vst.msk [vmem:[%s5] sm:$0xff] %vm1069, %v1068
  // Predicated region
  $region22: #{lstm_apply.1} parent=0 // pred_check
    _
  $region23: #{lstm_apply.1} parent=0 // pred_check_branch
    %1072 = sbr.rel (0) target = $region25
  $region24: #{lstm_apply.1} parent=0 // pred_region
    _
  $region25: #{lstm_apply.1} parent=0 // pred_fallthru
    _
  // Predicated region
  $region26: #{lstm_apply.1} parent=0 // pred_check
    _
  $region27: #{lstm_apply.1} parent=0 // pred_check_branch
    %1074 = sbr.rel (0) target = $region29
  $region28: #{lstm_apply.1} parent=0 // pred_region
    _
  $region29: #{lstm_apply.1} parent=0 // pred_fallthru
    _

</llo_original>
